<compile_context>
chip_gen: v5e
topology: v5e:2x2
jax: 0.10.0
libtpu: 0.0.40
codegen_flags: <defaults>
</compile_context>

<pallas_src>
import jax
import jax.numpy as jnp
from jax.experimental import pallas as pl
from jax.experimental.pallas import tpu as pltpu

INPUT_SIZE = 4     # e.g. CartPole observation size
HIDDEN = 10
OUTPUT_SIZE = 2    # e.g. CartPole action count

TB = 128           # batch tile (lane axis) per grid step

# ---- packed parameter slab layout (single f32 [16, 128] buffer) -------------
SLAB_ROWS = 16     # >= HIDDEN, padded to a multiple of 8 sublanes
SLAB_COLS = 128    # one full lane width
W1_C0 = 0          # W1: rows 0:10, cols 0:4        (PyTorch [out, in] layout)
B1_C = 4           # b1: rows 0:10, col 4
W2_C0 = 8          # W2: rows 0:10, cols 8:18
B2_C = 18          # b2: rows 0:10, col 18
W3_C0 = 24         # W3: rows 0:2,  cols 24:34
B3_C = 34          # b3: rows 0:2,  col 34


def pack_params(w1, b1, w2, b2, w3, b3):
    """Pack PyTorch-layout params (W:[out,in], b:[out]) into one f32 slab."""
    slab = jnp.zeros((SLAB_ROWS, SLAB_COLS), jnp.float32)
    slab = slab.at[0:HIDDEN, W1_C0:W1_C0 + INPUT_SIZE].set(w1)
    slab = slab.at[0:HIDDEN, B1_C].set(b1)
    slab = slab.at[0:HIDDEN, W2_C0:W2_C0 + HIDDEN].set(w2)
    slab = slab.at[0:HIDDEN, B2_C].set(b2)
    slab = slab.at[0:OUTPUT_SIZE, W3_C0:W3_C0 + HIDDEN].set(w3)
    slab = slab.at[0:OUTPUT_SIZE, B3_C].set(b3)
    return slab


def _dense_vpu(slab_ref, w_c0, b_c, out_dim, in_dim, x):
    """y[o, b] = b[o] + sum_k W[o, k] * x[k, b], computed on the VPU.

    x: [in_dim, TB] (batch on lanes). Weight columns and the bias column are
    read from the packed slab with static slices; the in_dim loop is a short
    unrolled Python loop (max 10 iterations).
    """
    tb = x.shape[1]
    acc = jnp.broadcast_to(slab_ref[0:out_dim, b_c:b_c + 1], (out_dim, tb))
    for k in range(in_dim):
        w_col = slab_ref[0:out_dim, w_c0 + k:w_c0 + k + 1]     # [out, 1]
        acc = acc + w_col * x[k:k + 1, :]                       # -> [out, TB]
    return acc


def _net_kernel(slab_ref, x_ref, o_ref):
    # x_ref: [INPUT_SIZE, TB] f32, batch on the lane axis.
    x = x_ref[...].astype(jnp.float32)

    h1 = jnp.maximum(_dense_vpu(slab_ref, W1_C0, B1_C, HIDDEN, INPUT_SIZE, x), 0.0)
    h2 = jnp.maximum(_dense_vpu(slab_ref, W2_C0, B2_C, HIDDEN, HIDDEN, h1), 0.0)
    logits = _dense_vpu(slab_ref, W3_C0, B3_C, OUTPUT_SIZE, HIDDEN, h2)  # [2, TB]

    # softmax over the action dimension (== PyTorch F.softmax(x, dim=0) on a
    # single 1-D state vector), per batch column.
    m = jnp.max(logits, axis=0, keepdims=True)
    e = jnp.exp(logits - m)
    denom = jnp.sum(e, axis=0, keepdims=True)
    # exact divide (approx EUP reciprocal would cost ~1e-4 rel. error here)
    o_ref[...] = (e / denom).astype(o_ref.dtype)


def net_forward(x_batch, slab):
    """x_batch: [B, INPUT_SIZE] f32 -> [B, OUTPUT_SIZE] action probabilities."""
    B = x_batch.shape[0]
    n_tiles = pl.cdiv(B, TB)
    Bp = n_tiles * TB

    # Put the batch on the lane axis; pad to a multiple of TB with zeros
    # (padded columns are computed and sliced away — no NaNs are produced).
    xt = jnp.zeros((INPUT_SIZE, Bp), jnp.float32)
    xt = xt.at[:, :B].set(x_batch.astype(jnp.float32).T)

    out = pl.pallas_call(
        _net_kernel,
        out_shape=jax.ShapeDtypeStruct((OUTPUT_SIZE, Bp), jnp.float32),
        grid=(n_tiles,),
        in_specs=[
            pl.BlockSpec((SLAB_ROWS, SLAB_COLS), lambda i: (0, 0)),  # params, resident
            pl.BlockSpec((INPUT_SIZE, TB), lambda i: (0, i)),        # batch tile
        ],
        out_specs=pl.BlockSpec((OUTPUT_SIZE, TB), lambda i: (0, i)),
        compiler_params=pltpu.CompilerParams(
            dimension_semantics=("parallel",)),                      # v7x: 2 TCs
    )(slab, xt)

    return out[:, :B].T  # [B, OUTPUT_SIZE]


def net_forward_single(x_vec, slab):
    """Original Net.forward semantics: [INPUT_SIZE] -> [OUTPUT_SIZE] probs."""
    # TODO(synk): at B=1 this is pure launch/DMA overhead; in an RL rollout,
    # batch states (or fuse the whole rollout step) instead of calling per-step.
    return net_forward(x_vec.reshape(1, INPUT_SIZE), slab)[0]


def init_params(key):
    """PyTorch-style nn.Linear init, PyTorch layouts: W [out, in], b [out]."""
    def linear(k, fan_in, fan_out):
        kw, kb = jax.random.split(k)
        bound = 1.0 / jnp.sqrt(float(fan_in))
        w = jax.random.uniform(kw, (fan_out, fan_in), jnp.float32, -bound, bound)
        b = jax.random.uniform(kb, (fan_out,), jnp.float32, -bound, bound)
        return w, b

    k1, k2, k3 = jax.random.split(key, 3)
    w1, b1 = linear(k1, INPUT_SIZE, HIDDEN)
    w2, b2 = linear(k2, HIDDEN, HIDDEN)
    w3, b3 = linear(k3, HIDDEN, OUTPUT_SIZE)
    return (w1, b1, w2, b2, w3, b3)


def net_forward_ref(x_batch, params):
    """Pure-JAX reference (full f32 precision)."""
    w1, b1, w2, b2, w3, b3 = params
    dot = lambda a, b: jnp.dot(a, b, precision=jax.lax.Precision.HIGHEST)
    h1 = jnp.maximum(dot(x_batch, w1.T) + b1, 0.0)
    h2 = jnp.maximum(dot(h1, w2.T) + b2, 0.0)
    logits = dot(h2, w3.T) + b3
    return jax.nn.softmax(logits, axis=-1)


if __name__ == "__main__":
    key = jax.random.PRNGKey(0)
    kp, kx = jax.random.split(key)
    params = init_params(kp)
    slab = pack_params(*params)

    B = 256  # two batch tiles -> grid=(2,)
    x = jax.random.normal(kx, (B, INPUT_SIZE), jnp.float32)

    probs = net_forward(x, slab)
    probs = jax.block_until_ready(probs)

    ref = net_forward_ref(x, params)
    assert probs.shape == (B, OUTPUT_SIZE)
    assert jnp.allclose(probs, ref, atol=1e-5, rtol=1e-5)
    assert jnp.allclose(jnp.sum(probs, axis=-1), 1.0, atol=1e-5)

    # Single-state path (exactly the original Net.forward signature).
    p1 = jax.block_until_ready(net_forward_single(x[0], slab))
    assert p1.shape == (OUTPUT_SIZE,)
    assert jnp.allclose(p1, ref[0], atol=1e-5, rtol=1e-5)

    print("KERNEL_OK")
</pallas_src>

<mosaic_0001>
module attributes {stable_mosaic.version = 11 : i64} {
  func.func @_net_kernel(%arg0: i32, %arg1: memref<16x128xf32, #tpu.memory_space<vmem>>, %arg2: memref<4x128xf32, #tpu.memory_space<vmem>>, %arg3: memref<2x128xf32, #tpu.memory_space<vmem>>) attributes {dimension_semantics = [#tpu.dimension_semantics<parallel>], iteration_bounds = array<i64: 2>, scalar_prefetch = 0 : i64, scratch_operands = 0 : i64, tpu.core_type = #tpu.core_type<tc>, window_params = [{pipeline_mode = #tpu.pipeline_mode<synchronous>, transform_indices = @transform_0, window_bounds = array<i64: 16, 128>}, {transform_indices = @transform_1, window_bounds = array<i64: 4, 128>}, {transform_indices = @transform_2, window_bounds = array<i64: 2, 128>}]} {
    %c0 = arith.constant 0 : index
    %c0_0 = arith.constant 0 : index
    %0 = vector.load %arg2[%c0, %c0_0] : memref<4x128xf32, #tpu.memory_space<vmem>>, vector<4x128xf32>
    %c0_1 = arith.constant 0 : index
    %c4 = arith.constant 4 : index
    %1 = vector.load %arg1[%c0_1, %c4] : memref<16x128xf32, #tpu.memory_space<vmem>>, vector<10x1xf32>
    %2 = vector.shape_cast %1 : vector<10x1xf32> to vector<10x1xf32>
    %3 = vector.broadcast %2 : vector<10x1xf32> to vector<10x128xf32>
    %c0_2 = arith.constant 0 : index
    %c0_3 = arith.constant 0 : index
    %4 = vector.load %arg1[%c0_2, %c0_3] : memref<16x128xf32, #tpu.memory_space<vmem>>, vector<10x1xf32>
    %5 = vector.extract_strided_slice %0 {offsets = [0, 0], sizes = [1, 128], strides = [1, 1]} : vector<4x128xf32> to vector<1x128xf32>
    %6 = vector.broadcast %4 : vector<10x1xf32> to vector<10x128xf32>
    %7 = vector.broadcast %5 : vector<1x128xf32> to vector<10x128xf32>
    %8 = arith.mulf %6, %7 : vector<10x128xf32>
    %9 = arith.addf %3, %8 : vector<10x128xf32>
    %c0_4 = arith.constant 0 : index
    %c1 = arith.constant 1 : index
    %10 = vector.load %arg1[%c0_4, %c1] : memref<16x128xf32, #tpu.memory_space<vmem>>, vector<10x1xf32>
    %11 = vector.extract_strided_slice %0 {offsets = [1, 0], sizes = [1, 128], strides = [1, 1]} : vector<4x128xf32> to vector<1x128xf32>
    %12 = vector.broadcast %10 : vector<10x1xf32> to vector<10x128xf32>
    %13 = vector.broadcast %11 : vector<1x128xf32> to vector<10x128xf32>
    %14 = arith.mulf %12, %13 : vector<10x128xf32>
    %15 = arith.addf %9, %14 : vector<10x128xf32>
    %c0_5 = arith.constant 0 : index
    %c2 = arith.constant 2 : index
    %16 = vector.load %arg1[%c0_5, %c2] : memref<16x128xf32, #tpu.memory_space<vmem>>, vector<10x1xf32>
    %17 = vector.extract_strided_slice %0 {offsets = [2, 0], sizes = [1, 128], strides = [1, 1]} : vector<4x128xf32> to vector<1x128xf32>
    %18 = vector.broadcast %16 : vector<10x1xf32> to vector<10x128xf32>
    %19 = vector.broadcast %17 : vector<1x128xf32> to vector<10x128xf32>
    %20 = arith.mulf %18, %19 : vector<10x128xf32>
    %21 = arith.addf %15, %20 : vector<10x128xf32>
    %c0_6 = arith.constant 0 : index
    %c3 = arith.constant 3 : index
    %22 = vector.load %arg1[%c0_6, %c3] : memref<16x128xf32, #tpu.memory_space<vmem>>, vector<10x1xf32>
    %23 = vector.extract_strided_slice %0 {offsets = [3, 0], sizes = [1, 128], strides = [1, 1]} : vector<4x128xf32> to vector<1x128xf32>
    %24 = vector.broadcast %22 : vector<10x1xf32> to vector<10x128xf32>
    %25 = vector.broadcast %23 : vector<1x128xf32> to vector<10x128xf32>
    %26 = arith.mulf %24, %25 : vector<10x128xf32>
    %27 = arith.addf %21, %26 : vector<10x128xf32>
    %cst = arith.constant 0.000000e+00 : f32
    %28 = vector.broadcast %cst : f32 to vector<10x128xf32>
    %29 = arith.maximumf %27, %28 : vector<10x128xf32>
    %c0_7 = arith.constant 0 : index
    %c18 = arith.constant 18 : index
    %30 = vector.load %arg1[%c0_7, %c18] : memref<16x128xf32, #tpu.memory_space<vmem>>, vector<10x1xf32>
    %31 = vector.shape_cast %30 : vector<10x1xf32> to vector<10x1xf32>
    %32 = vector.broadcast %31 : vector<10x1xf32> to vector<10x128xf32>
    %c0_8 = arith.constant 0 : index
    %c8 = arith.constant 8 : index
    %33 = vector.load %arg1[%c0_8, %c8] : memref<16x128xf32, #tpu.memory_space<vmem>>, vector<10x1xf32>
    %34 = vector.extract_strided_slice %29 {offsets = [0, 0], sizes = [1, 128], strides = [1, 1]} : vector<10x128xf32> to vector<1x128xf32>
    %35 = vector.broadcast %33 : vector<10x1xf32> to vector<10x128xf32>
    %36 = vector.broadcast %34 : vector<1x128xf32> to vector<10x128xf32>
    %37 = arith.mulf %35, %36 : vector<10x128xf32>
    %38 = arith.addf %32, %37 : vector<10x128xf32>
    %c0_9 = arith.constant 0 : index
    %c9 = arith.constant 9 : index
    %39 = vector.load %arg1[%c0_9, %c9] : memref<16x128xf32, #tpu.memory_space<vmem>>, vector<10x1xf32>
    %40 = vector.extract_strided_slice %29 {offsets = [1, 0], sizes = [1, 128], strides = [1, 1]} : vector<10x128xf32> to vector<1x128xf32>
    %41 = vector.broadcast %39 : vector<10x1xf32> to vector<10x128xf32>
    %42 = vector.broadcast %40 : vector<1x128xf32> to vector<10x128xf32>
    %43 = arith.mulf %41, %42 : vector<10x128xf32>
    %44 = arith.addf %38, %43 : vector<10x128xf32>
    %c0_10 = arith.constant 0 : index
    %c10 = arith.constant 10 : index
    %45 = vector.load %arg1[%c0_10, %c10] : memref<16x128xf32, #tpu.memory_space<vmem>>, vector<10x1xf32>
    %46 = vector.extract_strided_slice %29 {offsets = [2, 0], sizes = [1, 128], strides = [1, 1]} : vector<10x128xf32> to vector<1x128xf32>
    %47 = vector.broadcast %45 : vector<10x1xf32> to vector<10x128xf32>
    %48 = vector.broadcast %46 : vector<1x128xf32> to vector<10x128xf32>
    %49 = arith.mulf %47, %48 : vector<10x128xf32>
    %50 = arith.addf %44, %49 : vector<10x128xf32>
    %c0_11 = arith.constant 0 : index
    %c11 = arith.constant 11 : index
    %51 = vector.load %arg1[%c0_11, %c11] : memref<16x128xf32, #tpu.memory_space<vmem>>, vector<10x1xf32>
    %52 = vector.extract_strided_slice %29 {offsets = [3, 0], sizes = [1, 128], strides = [1, 1]} : vector<10x128xf32> to vector<1x128xf32>
    %53 = vector.broadcast %51 : vector<10x1xf32> to vector<10x128xf32>
    %54 = vector.broadcast %52 : vector<1x128xf32> to vector<10x128xf32>
    %55 = arith.mulf %53, %54 : vector<10x128xf32>
    %56 = arith.addf %50, %55 : vector<10x128xf32>
    %c0_12 = arith.constant 0 : index
    %c12 = arith.constant 12 : index
    %57 = vector.load %arg1[%c0_12, %c12] : memref<16x128xf32, #tpu.memory_space<vmem>>, vector<10x1xf32>
    %58 = vector.extract_strided_slice %29 {offsets = [4, 0], sizes = [1, 128], strides = [1, 1]} : vector<10x128xf32> to vector<1x128xf32>
    %59 = vector.broadcast %57 : vector<10x1xf32> to vector<10x128xf32>
    %60 = vector.broadcast %58 : vector<1x128xf32> to vector<10x128xf32>
    %61 = arith.mulf %59, %60 : vector<10x128xf32>
    %62 = arith.addf %56, %61 : vector<10x128xf32>
    %c0_13 = arith.constant 0 : index
    %c13 = arith.constant 13 : index
    %63 = vector.load %arg1[%c0_13, %c13] : memref<16x128xf32, #tpu.memory_space<vmem>>, vector<10x1xf32>
    %64 = vector.extract_strided_slice %29 {offsets = [5, 0], sizes = [1, 128], strides = [1, 1]} : vector<10x128xf32> to vector<1x128xf32>
    %65 = vector.broadcast %63 : vector<10x1xf32> to vector<10x128xf32>
    %66 = vector.broadcast %64 : vector<1x128xf32> to vector<10x128xf32>
    %67 = arith.mulf %65, %66 : vector<10x128xf32>
    %68 = arith.addf %62, %67 : vector<10x128xf32>
    %c0_14 = arith.constant 0 : index
    %c14 = arith.constant 14 : index
    %69 = vector.load %arg1[%c0_14, %c14] : memref<16x128xf32, #tpu.memory_space<vmem>>, vector<10x1xf32>
    %70 = vector.extract_strided_slice %29 {offsets = [6, 0], sizes = [1, 128], strides = [1, 1]} : vector<10x128xf32> to vector<1x128xf32>
    %71 = vector.broadcast %69 : vector<10x1xf32> to vector<10x128xf32>
    %72 = vector.broadcast %70 : vector<1x128xf32> to vector<10x128xf32>
    %73 = arith.mulf %71, %72 : vector<10x128xf32>
    %74 = arith.addf %68, %73 : vector<10x128xf32>
    %c0_15 = arith.constant 0 : index
    %c15 = arith.constant 15 : index
    %75 = vector.load %arg1[%c0_15, %c15] : memref<16x128xf32, #tpu.memory_space<vmem>>, vector<10x1xf32>
    %76 = vector.extract_strided_slice %29 {offsets = [7, 0], sizes = [1, 128], strides = [1, 1]} : vector<10x128xf32> to vector<1x128xf32>
    %77 = vector.broadcast %75 : vector<10x1xf32> to vector<10x128xf32>
    %78 = vector.broadcast %76 : vector<1x128xf32> to vector<10x128xf32>
    %79 = arith.mulf %77, %78 : vector<10x128xf32>
    %80 = arith.addf %74, %79 : vector<10x128xf32>
    %c0_16 = arith.constant 0 : index
    %c16 = arith.constant 16 : index
    %81 = vector.load %arg1[%c0_16, %c16] : memref<16x128xf32, #tpu.memory_space<vmem>>, vector<10x1xf32>
    %82 = vector.extract_strided_slice %29 {offsets = [8, 0], sizes = [1, 128], strides = [1, 1]} : vector<10x128xf32> to vector<1x128xf32>
    %83 = vector.broadcast %81 : vector<10x1xf32> to vector<10x128xf32>
    %84 = vector.broadcast %82 : vector<1x128xf32> to vector<10x128xf32>
    %85 = arith.mulf %83, %84 : vector<10x128xf32>
    %86 = arith.addf %80, %85 : vector<10x128xf32>
    %c0_17 = arith.constant 0 : index
    %c17 = arith.constant 17 : index
    %87 = vector.load %arg1[%c0_17, %c17] : memref<16x128xf32, #tpu.memory_space<vmem>>, vector<10x1xf32>
    %88 = vector.extract_strided_slice %29 {offsets = [9, 0], sizes = [1, 128], strides = [1, 1]} : vector<10x128xf32> to vector<1x128xf32>
    %89 = vector.broadcast %87 : vector<10x1xf32> to vector<10x128xf32>
    %90 = vector.broadcast %88 : vector<1x128xf32> to vector<10x128xf32>
    %91 = arith.mulf %89, %90 : vector<10x128xf32>
    %92 = arith.addf %86, %91 : vector<10x128xf32>
    %cst_18 = arith.constant 0.000000e+00 : f32
    %93 = vector.broadcast %cst_18 : f32 to vector<10x128xf32>
    %94 = arith.maximumf %92, %93 : vector<10x128xf32>
    %c0_19 = arith.constant 0 : index
    %c34 = arith.constant 34 : index
    %95 = vector.load %arg1[%c0_19, %c34] : memref<16x128xf32, #tpu.memory_space<vmem>>, vector<2x1xf32>
    %96 = vector.shape_cast %95 : vector<2x1xf32> to vector<2x1xf32>
    %97 = vector.broadcast %96 : vector<2x1xf32> to vector<2x128xf32>
    %c0_20 = arith.constant 0 : index
    %c24 = arith.constant 24 : index
    %98 = vector.load %arg1[%c0_20, %c24] : memref<16x128xf32, #tpu.memory_space<vmem>>, vector<2x1xf32>
    %99 = vector.extract_strided_slice %94 {offsets = [0, 0], sizes = [1, 128], strides = [1, 1]} : vector<10x128xf32> to vector<1x128xf32>
    %100 = vector.broadcast %98 : vector<2x1xf32> to vector<2x128xf32>
    %101 = vector.broadcast %99 : vector<1x128xf32> to vector<2x128xf32>
    %102 = arith.mulf %100, %101 : vector<2x128xf32>
    %103 = arith.addf %97, %102 : vector<2x128xf32>
    %c0_21 = arith.constant 0 : index
    %c25 = arith.constant 25 : index
    %104 = vector.load %arg1[%c0_21, %c25] : memref<16x128xf32, #tpu.memory_space<vmem>>, vector<2x1xf32>
    %105 = vector.extract_strided_slice %94 {offsets = [1, 0], sizes = [1, 128], strides = [1, 1]} : vector<10x128xf32> to vector<1x128xf32>
    %106 = vector.broadcast %104 : vector<2x1xf32> to vector<2x128xf32>
    %107 = vector.broadcast %105 : vector<1x128xf32> to vector<2x128xf32>
    %108 = arith.mulf %106, %107 : vector<2x128xf32>
    %109 = arith.addf %103, %108 : vector<2x128xf32>
    %c0_22 = arith.constant 0 : index
    %c26 = arith.constant 26 : index
    %110 = vector.load %arg1[%c0_22, %c26] : memref<16x128xf32, #tpu.memory_space<vmem>>, vector<2x1xf32>
    %111 = vector.extract_strided_slice %94 {offsets = [2, 0], sizes = [1, 128], strides = [1, 1]} : vector<10x128xf32> to vector<1x128xf32>
    %112 = vector.broadcast %110 : vector<2x1xf32> to vector<2x128xf32>
    %113 = vector.broadcast %111 : vector<1x128xf32> to vector<2x128xf32>
    %114 = arith.mulf %112, %113 : vector<2x128xf32>
    %115 = arith.addf %109, %114 : vector<2x128xf32>
    %c0_23 = arith.constant 0 : index
    %c27 = arith.constant 27 : index
    %116 = vector.load %arg1[%c0_23, %c27] : memref<16x128xf32, #tpu.memory_space<vmem>>, vector<2x1xf32>
    %117 = vector.extract_strided_slice %94 {offsets = [3, 0], sizes = [1, 128], strides = [1, 1]} : vector<10x128xf32> to vector<1x128xf32>
    %118 = vector.broadcast %116 : vector<2x1xf32> to vector<2x128xf32>
    %119 = vector.broadcast %117 : vector<1x128xf32> to vector<2x128xf32>
    %120 = arith.mulf %118, %119 : vector<2x128xf32>
    %121 = arith.addf %115, %120 : vector<2x128xf32>
    %c0_24 = arith.constant 0 : index
    %c28 = arith.constant 28 : index
    %122 = vector.load %arg1[%c0_24, %c28] : memref<16x128xf32, #tpu.memory_space<vmem>>, vector<2x1xf32>
    %123 = vector.extract_strided_slice %94 {offsets = [4, 0], sizes = [1, 128], strides = [1, 1]} : vector<10x128xf32> to vector<1x128xf32>
    %124 = vector.broadcast %122 : vector<2x1xf32> to vector<2x128xf32>
    %125 = vector.broadcast %123 : vector<1x128xf32> to vector<2x128xf32>
    %126 = arith.mulf %124, %125 : vector<2x128xf32>
    %127 = arith.addf %121, %126 : vector<2x128xf32>
    %c0_25 = arith.constant 0 : index
    %c29 = arith.constant 29 : index
    %128 = vector.load %arg1[%c0_25, %c29] : memref<16x128xf32, #tpu.memory_space<vmem>>, vector<2x1xf32>
    %129 = vector.extract_strided_slice %94 {offsets = [5, 0], sizes = [1, 128], strides = [1, 1]} : vector<10x128xf32> to vector<1x128xf32>
    %130 = vector.broadcast %128 : vector<2x1xf32> to vector<2x128xf32>
    %131 = vector.broadcast %129 : vector<1x128xf32> to vector<2x128xf32>
    %132 = arith.mulf %130, %131 : vector<2x128xf32>
    %133 = arith.addf %127, %132 : vector<2x128xf32>
    %c0_26 = arith.constant 0 : index
    %c30 = arith.constant 30 : index
    %134 = vector.load %arg1[%c0_26, %c30] : memref<16x128xf32, #tpu.memory_space<vmem>>, vector<2x1xf32>
    %135 = vector.extract_strided_slice %94 {offsets = [6, 0], sizes = [1, 128], strides = [1, 1]} : vector<10x128xf32> to vector<1x128xf32>
    %136 = vector.broadcast %134 : vector<2x1xf32> to vector<2x128xf32>
    %137 = vector.broadcast %135 : vector<1x128xf32> to vector<2x128xf32>
    %138 = arith.mulf %136, %137 : vector<2x128xf32>
    %139 = arith.addf %133, %138 : vector<2x128xf32>
    %c0_27 = arith.constant 0 : index
    %c31 = arith.constant 31 : index
    %140 = vector.load %arg1[%c0_27, %c31] : memref<16x128xf32, #tpu.memory_space<vmem>>, vector<2x1xf32>
    %141 = vector.extract_strided_slice %94 {offsets = [7, 0], sizes = [1, 128], strides = [1, 1]} : vector<10x128xf32> to vector<1x128xf32>
    %142 = vector.broadcast %140 : vector<2x1xf32> to vector<2x128xf32>
    %143 = vector.broadcast %141 : vector<1x128xf32> to vector<2x128xf32>
    %144 = arith.mulf %142, %143 : vector<2x128xf32>
    %145 = arith.addf %139, %144 : vector<2x128xf32>
    %c0_28 = arith.constant 0 : index
    %c32 = arith.constant 32 : index
    %146 = vector.load %arg1[%c0_28, %c32] : memref<16x128xf32, #tpu.memory_space<vmem>>, vector<2x1xf32>
    %147 = vector.extract_strided_slice %94 {offsets = [8, 0], sizes = [1, 128], strides = [1, 1]} : vector<10x128xf32> to vector<1x128xf32>
    %148 = vector.broadcast %146 : vector<2x1xf32> to vector<2x128xf32>
    %149 = vector.broadcast %147 : vector<1x128xf32> to vector<2x128xf32>
    %150 = arith.mulf %148, %149 : vector<2x128xf32>
    %151 = arith.addf %145, %150 : vector<2x128xf32>
    %c0_29 = arith.constant 0 : index
    %c33 = arith.constant 33 : index
    %152 = vector.load %arg1[%c0_29, %c33] : memref<16x128xf32, #tpu.memory_space<vmem>>, vector<2x1xf32>
    %153 = vector.extract_strided_slice %94 {offsets = [9, 0], sizes = [1, 128], strides = [1, 1]} : vector<10x128xf32> to vector<1x128xf32>
    %154 = vector.broadcast %152 : vector<2x1xf32> to vector<2x128xf32>
    %155 = vector.broadcast %153 : vector<1x128xf32> to vector<2x128xf32>
    %156 = arith.mulf %154, %155 : vector<2x128xf32>
    %157 = arith.addf %151, %156 : vector<2x128xf32>
    %cst_30 = arith.constant dense<0xFF800000> : vector<128xf32>
    %158 = vector.multi_reduction <maximumf>, %157, %cst_30 [0] : vector<2x128xf32> to vector<128xf32>
    %159 = vector.shape_cast %158 : vector<128xf32> to vector<1x128xf32>
    %160 = vector.broadcast %159 : vector<1x128xf32> to vector<2x128xf32>
    %161 = arith.subf %157, %160 : vector<2x128xf32>
    %162 = math.exp %161 : vector<2x128xf32>
    %cst_31 = arith.constant dense<0.000000e+00> : vector<128xf32>
    %163 = vector.multi_reduction <add>, %162, %cst_31 [0] : vector<2x128xf32> to vector<128xf32>
    %164 = vector.shape_cast %163 : vector<128xf32> to vector<1x128xf32>
    %165 = vector.broadcast %164 : vector<1x128xf32> to vector<2x128xf32>
    %166 = arith.divf %162, %165 : vector<2x128xf32>
    %c0_32 = arith.constant 0 : index
    %c0_33 = arith.constant 0 : index
    %167 = vector.load %arg3[%c0_32, %c0_33] : memref<2x128xf32, #tpu.memory_space<vmem>>, vector<2x128xf32>
    tpu.vector_store %arg3[%c0_32, %c0_33], %166 {strides = array<i32>} : memref<2x128xf32, #tpu.memory_space<vmem>>, vector<2x128xf32>,
    return
  }
  func.func @transform_0(%arg0: i32) -> (i32, i32) {
    %c0_i32 = arith.constant 0 : i32
    %c0_i32_0 = arith.constant 0 : i32
    %c0_i32_1 = arith.constant 0 : i32
    return %c0_i32, %c0_i32_0 : i32, i32
  }
  func.func @transform_1(%arg0: i32) -> (i32, i32) {
    %c0_i32 = arith.constant 0 : i32
    %c0_i32_0 = arith.constant 0 : i32
    return %c0_i32, %arg0 : i32, i32
  }
  func.func @transform_2(%arg0: i32) -> (i32, i32) {
    %c0_i32 = arith.constant 0 : i32
    %c0_i32_0 = arith.constant 0 : i32
    return %c0_i32, %arg0 : i32, i32
  }
}

</mosaic_0001>

<llo_original>
// kernel: tpu_custom_call.1
$region0: #{tpu_custom_call.1}
  #allocation0 [shape = 'u32[]', space=smem, size = 0x4, offset = 0x4, fixed_abs, tag = 'smem constant byte address 0x4 - core index']
  #allocation1 [shape = 'u32[72,128]{1,0:T(1,128)}', space=vmem, size = 0x9000, scoped, tag = 'internal scratch']
  %s0 = inlined_call_operand.hbm [shape: f32[16,128], index: 0, kind: input, shape index: {}]
  %s1 = inlined_call_operand.hbm [shape: f32[4,256], index: 1, kind: input, shape index: {}]
  %s2 = inlined_call_operand.hbm [shape: f32[2,256], index: 2, kind: output, shape index: {}]
  %s3 = sld [smem:[#allocation0]]
  $region49: #{tpu_custom_call.1} parent=0
    _
  %s5 = ssub.s32 1, %s3
  %s6 = scalar_select 0, %s5, %s3
  $region1: #{tpu_custom_call.1} parent=0
    #allocation2 [shape = 'u8[8192]{0}', space=vmem, size = 0x2000, scoped, tag = 'input window, operand 0, single buffered']
    #allocation3 [shape = 's32[2]{0}', space=sflag, size = 0x8, scoped, tag = 'scoped memory for tpu_custom_call.1']
    #allocation4 [shape = 's32[2]{0}', space=sflag, size = 0x8, scoped, tag = 'scoped memory for tpu_custom_call.1']
    #allocation5 [shape = 'u8[4096]{0}', space=vmem, size = 0x1000, scoped, tag = 'input window, operand 1']
    #allocation6 [shape = 's32[2]{0}', space=sflag, size = 0x8, scoped, tag = 'scoped memory for tpu_custom_call.1']
    #allocation7 [shape = 'u8[2048]{0}', space=vmem, size = 0x800, scoped, tag = 'output window, operand 0']
    %7 = vsyncpa [#allocation3], 0
    %8 = vsyncpa [#allocation6], 0
    %s9 = scalar_lea.sflag [#allocation6], 1
    %10 = vsyncpa %s9, 0
    %11 = vsyncpa [#allocation4], 0
    %s12 = scalar_lea.sflag [#allocation4], 1
    %13 = vsyncpa %s12, 0
    loop: start=0, step=1, limit=4
    $region2: #{tpu_custom_call.1} parent=1 // loop_pre_header
      _
    $region3: #{tpu_custom_call.1} parent=1 // loop_header
      %s15 = sphi 0, %s19
      %p16 = scmp.ge.s32.totalorder %s15, 4
      %s23 = sphi 0, %s23
      %s25 = sphi 0, %s23
      %s26 = sphi 0, %s25
      %s40 = sphi 0, %s26
      %s46 = sphi 0, %s48
      %s49 = sphi 0, %s46
      %s50 = sphi 0, %s49
      %s66 = sphi 0, %s50
      %s72 = sphi 0, %s74
      %s75 = sphi 0, %s72
      %s76 = sphi 0, %s75
      %s92 = sphi 0, %s76
    $region4: #{tpu_custom_call.1} parent=1 // loop_header_branch
      %18 = sbr.rel (%p16) target = $region8
    $region5: #{tpu_custom_call.1} parent=1 // loop_body
      %s20 = ssub.s32 %s15, 1
      %s21 = ssub.s32 %s15, 2
      %s22 = sadd.s32 %s15, 1
      %s24 = sadd.s32 %s23, 1
      %p27 = scmp.eq.s32.totalorder %s15, 1
      %p28 = scmp.ne.s32.totalorder %s23, %s25
      %p29 = scmp.eq.s32.totalorder %s15, 0
      %p30 = por %p28, %p29
      %p31 = scmp.ne.s32.totalorder %s23, %s25
      %p32 = scmp.eq.s32.totalorder %s20, 1
      %p33 = por %p31, %p32
      %p34 = scmp.ne.s32.totalorder %s25, %s26
      %p35 = scmp.eq.s32.totalorder %s20, 0
      %p36 = por %p34, %p35
      %p37 = scmp.ne.s32.totalorder %s25, %s26
      %p38 = scmp.eq.s32.totalorder %s21, 1
      %p39 = por %p37, %p38
      %p41 = scmp.ne.s32.totalorder %s26, %s40
      %p42 = scmp.eq.s32.totalorder %s21, 0
      %p43 = por %p41, %p42
      %s44 = ssub.s32 %s15, %s22
      %p45 = scmp.eq.s32.totalorder %s44, 0
      %s47 = sadd.s32 %s46, 1
      %s48 = scalar_select %p45, %s46, %s47
      %p51 = pneg %p45
      %p52 = scmp.eq.s32.totalorder %s15, 1
      %p53 = por %p51, %p52
      %p54 = scmp.ne.s32.totalorder %s46, %s49
      %p55 = scmp.eq.s32.totalorder %s15, 0
      %p56 = por %p54, %p55
      %p57 = scmp.ne.s32.totalorder %s46, %s49
      %p58 = scmp.eq.s32.totalorder %s20, 1
      %p59 = por %p57, %p58
      %p60 = scmp.ne.s32.totalorder %s49, %s50
      %p61 = scmp.eq.s32.totalorder %s20, 0
      %p62 = por %p60, %p61
      %p63 = scmp.ne.s32.totalorder %s49, %s50
      %p64 = scmp.eq.s32.totalorder %s21, 1
      %p65 = por %p63, %p64
      %p67 = scmp.ne.s32.totalorder %s50, %s66
      %p68 = scmp.eq.s32.totalorder %s21, 0
      %p69 = por %p67, %p68
      %s70 = ssub.s32 %s15, %s22
      %p71 = scmp.eq.s32.totalorder %s70, 0
      %s73 = sadd.s32 %s72, 1
      %s74 = scalar_select %p71, %s72, %s73
      %p77 = pneg %p71
      %p78 = scmp.eq.s32.totalorder %s15, 1
      %p79 = por %p77, %p78
      %p80 = scmp.ne.s32.totalorder %s72, %s75
      %p81 = scmp.eq.s32.totalorder %s15, 0
      %p82 = por %p80, %p81
      %p83 = scmp.ne.s32.totalorder %s72, %s75
      %p84 = scmp.eq.s32.totalorder %s20, 1
      %p85 = por %p83, %p84
      %p86 = scmp.ne.s32.totalorder %s75, %s76
      %p87 = scmp.eq.s32.totalorder %s20, 0
      %p88 = por %p86, %p87
      %p89 = scmp.ne.s32.totalorder %s75, %s76
      %p90 = scmp.eq.s32.totalorder %s21, 1
      %p91 = por %p89, %p90
      %p93 = scmp.ne.s32.totalorder %s76, %s92
      %p94 = scmp.eq.s32.totalorder %s21, 0
      %p95 = por %p93, %p94
      %p96 = scmp.le.s32.totalorder 1, %s15
      %p97 = scmp.lt.s32.totalorder %s15, 3
      %p98 = pnand %p96, %p97
      %p99 = pneg %p98
      // Predicated region
      $region9: #{tpu_custom_call.1} parent=5 // pred_check
        _
      $region10: #{tpu_custom_call.1} parent=5 // pred_check_branch
        %101 = sbr.rel (%p98) target = $region12
      $region11: #{tpu_custom_call.1} parent=5 // pred_region
        %s102 = ssub.s32 %s15, 1
        // Predicated region
        $region13: #{tpu_custom_call.1} parent=11 // pred_check
          %p103 = pneg %p36
        $region14: #{tpu_custom_call.1} parent=11 // pred_check_branch
          %105 = sbr.rel (%p103) target = $region16
        $region15: #{tpu_custom_call.1} parent=11 // pred_region
          %107 = vsyncadd [#allocation3], 0
          %s108 = sshll.u32 %s0, 4
          %s109 = int_to_ptr.hbm [resolvable:$true] %s108
          %s110 = sshll.u32 [#allocation2], 4
          %s111 = int_to_ptr.vmem [resolvable:$true] %s110
          %116 = dma.hbm_to_vmem [thread:$0]  %s109, 256, %s111, [#allocation3], 128, 128, 8
        $region16: #{tpu_custom_call.1} parent=11 // pred_fallthru
          _
      $region12: #{tpu_custom_call.1} parent=5 // pred_fallthru
        _
      %p117 = scmp.lt.s32.totalorder %s15, 2
      // Predicated region
      $region17: #{tpu_custom_call.1} parent=5 // pred_check
        %p118 = pneg %p117
      $region18: #{tpu_custom_call.1} parent=5 // pred_check_branch
        %120 = sbr.rel (%p118) target = $region20
      $region19: #{tpu_custom_call.1} parent=5 // pred_region
        // Predicated region
        $region21: #{tpu_custom_call.1} parent=19 // pred_check
          %p121 = pneg %p56
        $region22: #{tpu_custom_call.1} parent=19 // pred_check_branch
          %123 = sbr.rel (%p121) target = $region24
        $region23: #{tpu_custom_call.1} parent=19 // pred_region
          %s124 = sand.u32 %s46, 1
          %s125 = scalar_lea.sflag [#allocation6], %s124
          %s126 = sand.u32 %s46, 1
          %s127 = smul.addr %s126, 4
          %s128 = scalar_lea.vmem [#allocation5], %s127
          %130 = vsyncadd %s125, 0
          %s131 = smul.addr %s15, 4
          %s132 = scalar_lea.hbm %s1, %s131
          %s134 = sshll.u32 %s132, 4
          %s135 = int_to_ptr.hbm [resolvable:$true] %s134
          %s136 = sshll.u32 %s128, 4
          %s137 = int_to_ptr.vmem [resolvable:$true] %s136
          %139 = dma.hbm_to_vmem [thread:$0]  %s135, 64, %s137, %s125
        $region24: #{tpu_custom_call.1} parent=19 // pred_fallthru
          _
      $region20: #{tpu_custom_call.1} parent=5 // pred_fallthru
        _
      %p140 = scmp.le.s32.totalorder 1, %s15
      %p141 = scmp.lt.s32.totalorder %s15, 3
      %p142 = pnand %p140, %p141
      %p143 = pneg %p142
      // Predicated region
      $region25: #{tpu_custom_call.1} parent=5 // pred_check
        _
      $region26: #{tpu_custom_call.1} parent=5 // pred_check_branch
        %145 = sbr.rel (%p142) target = $region28
      $region27: #{tpu_custom_call.1} parent=5 // pred_region
        %s146 = ssub.s32 %s15, 1
        // Predicated region
        $region29: #{tpu_custom_call.1} parent=27 // pred_check
          %p147 = pneg %p36
        $region30: #{tpu_custom_call.1} parent=27 // pred_check_branch
          %149 = sbr.rel (%p147) target = $region32
        $region31: #{tpu_custom_call.1} parent=27 // pred_region
          %151 = dma.done [#allocation3], 256
        $region32: #{tpu_custom_call.1} parent=27 // pred_fallthru
          _
        %s152 = sand.u32 %s49, 1
        %s153 = scalar_lea.sflag [#allocation6], %s152
        %s154 = sand.u32 %s49, 1
        %s155 = smul.addr %s154, 4
        %s156 = scalar_lea.vmem [#allocation5], %s155
        // Predicated region
        $region33: #{tpu_custom_call.1} parent=27 // pred_check
          %p157 = pneg %p62
        $region34: #{tpu_custom_call.1} parent=27 // pred_check_branch
          %159 = sbr.rel (%p157) target = $region36
        $region35: #{tpu_custom_call.1} parent=27 // pred_region
          %161 = dma.done %s153, 64
        $region36: #{tpu_custom_call.1} parent=27 // pred_fallthru
          _
        %p162 = pneg %p36
        %p163 = pneg %p33
        %s164 = sand.u32 %s49, 1
        %s165 = scalar_lea.sflag [#allocation6], %s164
        %s166 = sand.u32 %s49, 1
        %s167 = smul.addr %s166, 4
        %s168 = scalar_lea.vmem [#allocation5], %s167
        %p169 = pneg %p62
        %p170 = pneg %p59
        %p171 = pneg %p88
        %p172 = pneg %p85
        %s173 = sand.u32 %s75, 1
        %s174 = scalar_lea.sflag [#allocation4], %s173
        %s175 = sand.u32 %s75, 1
        %s176 = smul.addr %s175, 2
        %s177 = scalar_lea.vmem [#allocation7], %s176
        %v178 = vld [vmem:[%s156] sm:$0xf]
        %v179 = vld [vmem:[#allocation2] sm:$0xff]
        %v180 = vld [vmem:[#allocation2 + $0x8] sm:$0x3]
        %182 = vset.pattern.permute.xlu0 4
        %183 = vperm.xlu0 %182, %v179
        %v184 = vpop.permute.xlu0 %183
        %187 = vset.pattern.permute.xlu0 4
        %188 = vperm.xlu0 %187, %v180
        %v189 = vpop.permute.xlu0 %188
        %191 = vset.pattern.permute.xlu0 0
        %192 = vperm.xlu0 %191, %v179
        %v193 = vpop.permute.xlu0 %192
        %195 = vset.pattern.permute.xlu0 0
        %196 = vperm.xlu0 %195, %v180
        %v197 = vpop.permute.xlu0 %196
        %v199 = vperm.slane %v178, 0
        %v200 = vmul.f32 %v193, %v199
        %v201 = vmul.f32 %v197, %v199
        %v202 = vadd.f32 %v184, %v200
        %v203 = vadd.f32 %v189, %v201
        %204 = vset.pattern.permute.xlu0 1
        %205 = vperm.xlu0 %204, %v179
        %v206 = vpop.permute.xlu0 %205
        %208 = vset.pattern.permute.xlu0 1
        %209 = vperm.xlu0 %208, %v180
        %v210 = vpop.permute.xlu0 %209
        %v212 = vperm.slane %v178, 1
        %v213 = vmul.f32 %v206, %v212
        %v214 = vmul.f32 %v210, %v212
        %v215 = vadd.f32 %v202, %v213
        %v216 = vadd.f32 %v203, %v214
        %217 = vset.pattern.permute.xlu0 2
        %218 = vperm.xlu0 %217, %v179
        %v219 = vpop.permute.xlu0 %218
        %221 = vset.pattern.permute.xlu0 2
        %222 = vperm.xlu0 %221, %v180
        %v223 = vpop.permute.xlu0 %222
        %v225 = vperm.slane %v178, 2
        %v226 = vmul.f32 %v219, %v225
        %v227 = vmul.f32 %v223, %v225
        %v228 = vadd.f32 %v215, %v226
        %v229 = vadd.f32 %v216, %v227
        %230 = vset.pattern.permute.xlu0 3
        %231 = vperm.xlu0 %230, %v179
        %v232 = vpop.permute.xlu0 %231
        %234 = vset.pattern.permute.xlu0 3
        %235 = vperm.xlu0 %234, %v180
        %v236 = vpop.permute.xlu0 %235
        %v238 = vperm.slane %v178, 3
        %v239 = vmul.f32 %v232, %v238
        %v240 = vmul.f32 %v236, %v238
        %v241 = vadd.f32 %v228, %v239
        %v242 = vadd.f32 %v229, %v240
        %v243 = vmax.f32 %v241, 0.0
        %v244 = vmax.f32 %v242, 0.0
        %245 = vset.pattern.permute.xlu0 18
        %246 = vperm.xlu0 %245, %v179
        %v247 = vpop.permute.xlu0 %246
        %249 = vset.pattern.permute.xlu0 18
        %250 = vperm.xlu0 %249, %v180
        %v251 = vpop.permute.xlu0 %250
        %253 = vset.pattern.permute.xlu0 8
        %254 = vperm.xlu0 %253, %v179
        %v255 = vpop.permute.xlu0 %254
        %257 = vset.pattern.permute.xlu0 8
        %258 = vperm.xlu0 %257, %v180
        %v259 = vpop.permute.xlu0 %258
        %v261 = vperm.slane %v243, 0
        %v262 = vmul.f32 %v255, %v261
        %v263 = vmul.f32 %v259, %v261
        %v264 = vadd.f32 %v247, %v262
        %v265 = vadd.f32 %v251, %v263
        %266 = vset.pattern.permute.xlu0 9
        %267 = vperm.xlu0 %266, %v179
        %v268 = vpop.permute.xlu0 %267
        %270 = vset.pattern.permute.xlu0 9
        %271 = vperm.xlu0 %270, %v180
        %v272 = vpop.permute.xlu0 %271
        %v274 = vperm.slane %v243, 1
        %v275 = vmul.f32 %v268, %v274
        %v276 = vmul.f32 %v272, %v274
        %v277 = vadd.f32 %v264, %v275
        %v278 = vadd.f32 %v265, %v276
        %279 = vset.pattern.permute.xlu0 10
        %280 = vperm.xlu0 %279, %v179
        %v281 = vpop.permute.xlu0 %280
        %283 = vset.pattern.permute.xlu0 10
        %284 = vperm.xlu0 %283, %v180
        %v285 = vpop.permute.xlu0 %284
        %v287 = vperm.slane %v243, 2
        %v288 = vmul.f32 %v281, %v287
        %v289 = vmul.f32 %v285, %v287
        %v290 = vadd.f32 %v277, %v288
        %v291 = vadd.f32 %v278, %v289
        %292 = vset.pattern.permute.xlu0 11
        %293 = vperm.xlu0 %292, %v179
        %v294 = vpop.permute.xlu0 %293
        %296 = vset.pattern.permute.xlu0 11
        %297 = vperm.xlu0 %296, %v180
        %v298 = vpop.permute.xlu0 %297
        %v300 = vperm.slane %v243, 3
        %v301 = vmul.f32 %v294, %v300
        %v302 = vmul.f32 %v298, %v300
        %v303 = vadd.f32 %v290, %v301
        %v304 = vadd.f32 %v291, %v302
        %305 = vset.pattern.permute.xlu0 12
        %306 = vperm.xlu0 %305, %v179
        %v307 = vpop.permute.xlu0 %306
        %309 = vset.pattern.permute.xlu0 12
        %310 = vperm.xlu0 %309, %v180
        %v311 = vpop.permute.xlu0 %310
        %v313 = vperm.slane %v243, 4
        %v314 = vmul.f32 %v307, %v313
        %v315 = vmul.f32 %v311, %v313
        %v316 = vadd.f32 %v303, %v314
        %v317 = vadd.f32 %v304, %v315
        %318 = vset.pattern.permute.xlu0 13
        %319 = vperm.xlu0 %318, %v179
        %v320 = vpop.permute.xlu0 %319
        %322 = vset.pattern.permute.xlu0 13
        %323 = vperm.xlu0 %322, %v180
        %v324 = vpop.permute.xlu0 %323
        %v326 = vperm.slane %v243, 5
        %v327 = vmul.f32 %v320, %v326
        %v328 = vmul.f32 %v324, %v326
        %v329 = vadd.f32 %v316, %v327
        %v330 = vadd.f32 %v317, %v328
        %331 = vset.pattern.permute.xlu0 14
        %332 = vperm.xlu0 %331, %v179
        %v333 = vpop.permute.xlu0 %332
        %335 = vset.pattern.permute.xlu0 14
        %336 = vperm.xlu0 %335, %v180
        %v337 = vpop.permute.xlu0 %336
        %v339 = vperm.slane %v243, 6
        %v340 = vmul.f32 %v333, %v339
        %v341 = vmul.f32 %v337, %v339
        %v342 = vadd.f32 %v329, %v340
        %v343 = vadd.f32 %v330, %v341
        %344 = vset.pattern.permute.xlu0 15
        %345 = vperm.xlu0 %344, %v179
        %v346 = vpop.permute.xlu0 %345
        %348 = vset.pattern.permute.xlu0 15
        %349 = vperm.xlu0 %348, %v180
        %v350 = vpop.permute.xlu0 %349
        %v352 = vperm.slane %v243, 7
        %v353 = vmul.f32 %v346, %v352
        %v354 = vmul.f32 %v350, %v352
        %v355 = vadd.f32 %v342, %v353
        %v356 = vadd.f32 %v343, %v354
        %357 = vset.pattern.permute.xlu0 16
        %358 = vperm.xlu0 %357, %v179
        %v359 = vpop.permute.xlu0 %358
        %361 = vset.pattern.permute.xlu0 16
        %362 = vperm.xlu0 %361, %v180
        %v363 = vpop.permute.xlu0 %362
        %v365 = vperm.slane %v244, 0
        %v366 = vmul.f32 %v359, %v365
        %v367 = vmul.f32 %v363, %v365
        %v368 = vadd.f32 %v355, %v366
        %v369 = vadd.f32 %v356, %v367
        %370 = vset.pattern.permute.xlu0 17
        %371 = vperm.xlu0 %370, %v179
        %v372 = vpop.permute.xlu0 %371
        %374 = vset.pattern.permute.xlu0 17
        %375 = vperm.xlu0 %374, %v180
        %v376 = vpop.permute.xlu0 %375
        %v378 = vperm.slane %v244, 1
        %v379 = vmul.f32 %v372, %v378
        %v380 = vmul.f32 %v376, %v378
        %v381 = vadd.f32 %v368, %v379
        %v382 = vadd.f32 %v369, %v380
        %v383 = vmax.f32 %v381, 0.0
        %v384 = vmax.f32 %v382, 0.0
        %v385 = vld [vmem:[#allocation2] sm:$0x3]
        %387 = vset.pattern.permute.xlu0 34
        %388 = vperm.xlu0 %387, %v385
        %v389 = vpop.permute.xlu0 %388
        %391 = vset.pattern.permute.xlu0 24
        %392 = vperm.xlu0 %391, %v385
        %v393 = vpop.permute.xlu0 %392
        %v395 = vperm.slane %v383, 0
        %v396 = vmul.f32 %v393, %v395
        %v397 = vadd.f32 %v389, %v396
        %398 = vset.pattern.permute.xlu0 25
        %399 = vperm.xlu0 %398, %v385
        %v400 = vpop.permute.xlu0 %399
        %v402 = vperm.slane %v383, 1
        %v403 = vmul.f32 %v400, %v402
        %v404 = vadd.f32 %v397, %v403
        %405 = vset.pattern.permute.xlu0 26
        %406 = vperm.xlu0 %405, %v385
        %v407 = vpop.permute.xlu0 %406
        %v409 = vperm.slane %v383, 2
        %v410 = vmul.f32 %v407, %v409
        %v411 = vadd.f32 %v404, %v410
        %412 = vset.pattern.permute.xlu0 27
        %413 = vperm.xlu0 %412, %v385
        %v414 = vpop.permute.xlu0 %413
        %v416 = vperm.slane %v383, 3
        %v417 = vmul.f32 %v414, %v416
        %v418 = vadd.f32 %v411, %v417
        %419 = vset.pattern.permute.xlu0 28
        %420 = vperm.xlu0 %419, %v385
        %v421 = vpop.permute.xlu0 %420
        %v423 = vperm.slane %v383, 4
        %v424 = vmul.f32 %v421, %v423
        %v425 = vadd.f32 %v418, %v424
        %426 = vset.pattern.permute.xlu0 29
        %427 = vperm.xlu0 %426, %v385
        %v428 = vpop.permute.xlu0 %427
        %v430 = vperm.slane %v383, 5
        %v431 = vmul.f32 %v428, %v430
        %v432 = vadd.f32 %v425, %v431
        %433 = vset.pattern.permute.xlu0 30
        %434 = vperm.xlu0 %433, %v385
        %v435 = vpop.permute.xlu0 %434
        %v437 = vperm.slane %v383, 6
        %v438 = vmul.f32 %v435, %v437
        %v439 = vadd.f32 %v432, %v438
        %440 = vset.pattern.permute.xlu0 31
        %441 = vperm.xlu0 %440, %v385
        %v442 = vpop.permute.xlu0 %441
        %v444 = vperm.slane %v383, 7
        %v445 = vmul.f32 %v442, %v444
        %v446 = vadd.f32 %v439, %v445
        %447 = vset.pattern.permute.xlu0 32
        %448 = vperm.xlu0 %447, %v385
        %v449 = vpop.permute.xlu0 %448
        %v451 = vperm.slane %v384, 0
        %v452 = vmul.f32 %v449, %v451
        %v453 = vadd.f32 %v446, %v452
        %454 = vset.pattern.permute.xlu0 33
        %455 = vperm.xlu0 %454, %v385
        %v456 = vpop.permute.xlu0 %455
        %v458 = vperm.slane %v384, 1
        %v459 = vmul.f32 %v456, %v458
        %v460 = vadd.f32 %v453, %v459
        %vm461 = vcmask 1041408
        %v462 = vsel %vm461, %v460, -inf
        %v463 = vrot.slane %v462, 4
        %v464 = vmax.f32 %v462, %v463
        %v465 = vrot.slane %v464, 2
        %v466 = vmax.f32 %v464, %v465
        %v467 = vrot.slane %v466, 1
        %v468 = vmax.f32 %v466, %v467
        %v469 = vsub.f32 %v460, %v468
        %v470 = vmul.f32 %v469, 1.442695
        %v471 = vpow.pop %v470
        %v472 = vsel %vm461, %v471, 0.0
        %v473 = vrot.slane %v472, 4
        %v474 = vadd.f32 %v472, %v473
        %v475 = vrot.slane %v474, 2
        %v476 = vadd.f32 %v474, %v475
        %v477 = vrot.slane %v476, 1
        %v478 = vadd.f32 %v476, %v477
        %v479 = vrcp.pop %v478
        %v480 = vmul.f32 %v478, %v479
        %v481 = vsub.f32 1.0, %v480
        %v482 = vmul.f32 %v479, %v481
        %v483 = vadd.f32 %v479, %v482
        %vm484 = vweird.f32 %v478
        %vm485 = vweird.f32 %v479
        %vm486 = vmor %vm484, %vm485
        %v487 = vsel %vm486, %v479, %v483
        %v488 = vand.u32 2147483647, %v478
        %vm489 = vcmp.eq.f32.partialorder %v488, 8.507059e+37
        %v490 = vand.u32 %v478, 2147483648
        %v491 = vor.u32 1.1754944e-38, %v490
        %v492 = vsel %vm489, %v491, %v487
        %v493 = vmul.f32 %v471, %v492
        %494 = vst [vmem:[%s177] sm:$0x3] %v493
        %s495 = sand.u32 %s75, 1
        %s496 = scalar_lea.sflag [#allocation4], %s495
        %s497 = sand.u32 %s75, 1
        %s498 = smul.addr %s497, 2
        %s499 = scalar_lea.vmem [#allocation7], %s498
        // Predicated region
        $region37: #{tpu_custom_call.1} parent=27 // pred_check
          %p500 = pneg %p85
        $region38: #{tpu_custom_call.1} parent=27 // pred_check_branch
          %502 = sbr.rel (%p500) target = $region40
        $region39: #{tpu_custom_call.1} parent=27 // pred_region
          %504 = vsyncadd %s496, 0
          %s505 = smul.addr %s20, 2
          %s506 = scalar_lea.hbm %s2, %s505
          %s508 = sshll.u32 %s499, 4
          %s509 = int_to_ptr.vmem [resolvable:$true] %s508
          %s510 = sshll.u32 %s506, 4
          %s511 = int_to_ptr.hbm [resolvable:$true] %s510
          %513 = dma.vmem_to_hbm [thread:$0]  %s509, 32, %s511, %s496
        $region40: #{tpu_custom_call.1} parent=27 // pred_fallthru
          _
      $region28: #{tpu_custom_call.1} parent=5 // pred_fallthru
        _
      %p514 = scmp.le.s32.totalorder 2, %s15
      // Predicated region
      $region41: #{tpu_custom_call.1} parent=5 // pred_check
        %p515 = pneg %p514
      $region42: #{tpu_custom_call.1} parent=5 // pred_check_branch
        %517 = sbr.rel (%p515) target = $region44
      $region43: #{tpu_custom_call.1} parent=5 // pred_region
        %s518 = ssub.s32 %s15, 2
        // Predicated region
        $region45: #{tpu_custom_call.1} parent=43 // pred_check
          %p519 = pneg %p91
        $region46: #{tpu_custom_call.1} parent=43 // pred_check_branch
          %521 = sbr.rel (%p519) target = $region48
        $region47: #{tpu_custom_call.1} parent=43 // pred_region
          %s522 = sand.u32 %s76, 1
          %s523 = scalar_lea.sflag [#allocation4], %s522
          %s524 = sand.u32 %s76, 1
          %s525 = smul.addr %s524, 2
          %s526 = scalar_lea.vmem [#allocation7], %s525
          %528 = dma.done %s523, 32
        $region48: #{tpu_custom_call.1} parent=43 // pred_fallthru
          _
      $region44: #{tpu_custom_call.1} parent=5 // pred_fallthru
        _
    $region6: #{tpu_custom_call.1} parent=1 // loop_footer
      %s19 = sadd.s32 1, %s15
    $region7: #{tpu_custom_call.1} parent=1 // loop_footer_branch
      %14 = sbr.rel target = $region3
    $region8: #{tpu_custom_call.1} parent=1 // loop_exit
      _
    %529 = vsyncpa [#allocation3], 1
    %s530 = scalar_lea.sflag [#allocation3], 1
    %531 = vsyncpa %s530, 1
    %532 = vsyncpa [#allocation6], 1
    %s533 = scalar_lea.sflag [#allocation6], 1
    %534 = vsyncpa %s533, 1
    %535 = vsyncpa [#allocation4], 1
    %s536 = scalar_lea.sflag [#allocation4], 1
    %537 = vsyncpa %s536, 1

</llo_original>
